<compile_context>
chip_gen: v7x
topology: tpu7x:2x2x1
jax: 0.10.0
libtpu: 0.0.40
codegen_flags: <defaults>
</compile_context>

<pallas_src>
import functools

import jax
import jax.numpy as jnp
import numpy as np
from jax.experimental import pallas as pl
from jax.experimental.pallas import tpu as pltpu


def _gauss_ce_kernel(pred_ref, side_ref, out_ref, acc_ref, *,
                     ignore_index, label_smoothing, use_focal, focal_gamma):
    i = pl.program_id(1)

    @pl.when(i == 0)
    def _():
        acc_ref[...] = jnp.zeros_like(acc_ref)

    # (C, T): classes on sublanes, points on lanes.  Cast in-kernel only.
    logits = pred_ref[...].astype(jnp.float32)
    side = side_ref[...]                              # (2, T) f32
    tgt = side[0:1, :].astype(jnp.int32)              # exact for small ints
    w = side[1:2, :]                                  # precomputed gaussian weight

    # log-softmax cross entropy; class axis = sublane axis (size C).
    m = jnp.max(logits, axis=0, keepdims=True)                      # (1, T)
    lse = jnp.log(jnp.sum(jnp.exp(logits - m), axis=0, keepdims=True)) + m
    cls = jax.lax.broadcasted_iota(jnp.int32, logits.shape, 0)
    picked = jnp.sum(jnp.where(cls == tgt, logits, 0.0), axis=0, keepdims=True)

    nll = lse - picked
    if label_smoothing > 0.0:
        smooth = lse - jnp.mean(logits, axis=0, keepdims=True)
        ce = (1.0 - label_smoothing) * nll + label_smoothing * smooth
    else:
        ce = nll

    # ignore_index (and tail padding, which is labeled ignore_index) -> 0 loss.
    seg_loss = jnp.where(tgt != ignore_index, ce, 0.0)

    if use_focal:
        p_t = jnp.exp(picked - lse)
        one_minus = 1.0 - p_t
        if focal_gamma == 2.0:
            pw = one_minus * one_minus
        elif focal_gamma == 1.0:
            pw = one_minus
        else:
            pw = one_minus ** focal_gamma
        seg_loss = seg_loss * pw          # focal_alpha applied once in wrapper

    # vreg-wide accumulate; no cross-lane reduce in the hot loop.
    acc_ref[...] += seg_loss * w

    @pl.when(i == pl.num_programs(1) - 1)
    def _():
        out_ref[...] = jnp.full(out_ref.shape, jnp.sum(acc_ref[...]),
                                dtype=jnp.float32)


def _default_num_cores():
    """2 only on dual-TensorCore parts (v7x); 1 on single-TC v5e/v6e."""
    try:
        kind = jax.devices()[0].device_kind.lower()
    except Exception:
        return 1
    return 2 if "v7" in kind else 1


def gauss_cross_entropy_loss0(pred, target, coord, offset, *,
                              loss_weight=1.0, ignore_index=-1,
                              sigma_left=0.1, sigma_right=0.4,
                              clamp_factor=2.0, min_val=0.1,
                              label_smoothing=0.0,
                              use_focal=False, focal_gamma=2.0,
                              focal_alpha=1.0,
                              tile_n=16384, num_cores=None,
                              pred_transfer_dtype=None):
    # TODO(synk): per-class `weight` vector of nn.CrossEntropyLoss is not
    # implemented (module default weight=None).
    N, C = pred.shape
    num_batches = int(offset.shape[0])
    # Tail padding is labeled ignore_index; it must not be a real class.
    assert not (0 <= int(ignore_index) < C), \
        "ignore_index must lie outside [0, num_classes)"

    if num_cores is None:
        num_cores = _default_num_cores()

    # offset2batch: cumulative offsets -> per-point batch index (sorted).
    batch = jnp.searchsorted(offset, jnp.arange(N), side="right").astype(jnp.int32)
    z = coord[:, 2].astype(jnp.float32)
    seg = target.astype(jnp.int32)

    # Per-batch mu via single-pass segmented reductions (replaces per-batch loop).
    ground_max = jax.ops.segment_max(jnp.where(seg == 0, z, -jnp.inf), batch,
                                     num_segments=num_batches,
                                     indices_are_sorted=True)
    plant_min = jax.ops.segment_min(jnp.where(seg == 1, z, jnp.inf), batch,
                                    num_segments=num_batches,
                                    indices_are_sorted=True)
    batch_min = jax.ops.segment_min(z, batch, num_segments=num_batches,
                                    indices_are_sorted=True)
    batch_max = jax.ops.segment_max(z, batch, num_segments=num_batches,
                                    indices_are_sorted=True)
    z_ground_max = jnp.where(jnp.isneginf(ground_max), batch_min, ground_max)
    z_plant_min = jnp.where(jnp.isposinf(plant_min), batch_max, plant_min)
    mu_b = z_ground_max + (z_plant_min - z_ground_max) * 0.5
    mu_point = mu_b[batch]                                          # (N,)

    # Asymmetric gaussian weight, computed once here (fuses with the stack/pad
    # that builds `side`); single fused exp via reciprocal-sigma select.
    d = z - mu_point
    is_left = z <= mu_point
    inv2s = jnp.where(is_left,
                      jnp.float32(1.0 / (2.0 * sigma_left * sigma_left)),
                      jnp.float32(1.0 / (2.0 * sigma_right * sigma_right)))
    w = jnp.exp(-(d * d) * inv2s)
    w = jnp.where(jnp.logical_and(jnp.logical_not(is_left),
                                  d > jnp.float32(clamp_factor * sigma_right)),
                  jnp.float32(min_val), w)

    # Lane-dense layout: point axis on lanes.  Clamp tile_n down when N is
    # small so we don't pad a tiny problem to 16K lanes per core.
    per_core = -(-N // num_cores)
    tile_n_eff = max(128, min(tile_n, ((per_core + 127) // 128) * 128))
    chunk = num_cores * tile_n_eff
    Np = ((N + chunk - 1) // chunk) * chunk
    pad = Np - N
    steps_per_core = Np // chunk

    # pred kept in its original dtype unless a narrower transfer dtype is
    # requested (v5e bandwidth trade-off); in-kernel math is always f32.
    pred_t = jnp.transpose(pred)
    if pred_transfer_dtype is not None:
        pred_t = pred_t.astype(pred_transfer_dtype)
    pred_t = jnp.pad(pred_t, ((0, 0), (0, pad)))                    # (C, Np)
    side = jnp.stack([
        jnp.pad(seg, (0, pad), constant_values=ignore_index).astype(jnp.float32),
        jnp.pad(w, (0, pad)),
    ], axis=0)                                                      # (2, Np) f32

    kernel = functools.partial(
        _gauss_ce_kernel,
        ignore_index=int(ignore_index),
        label_smoothing=float(label_smoothing),
        use_focal=bool(use_focal),
        focal_gamma=float(focal_gamma))

    partials = pl.pallas_call(
        kernel,
        out_shape=jax.ShapeDtypeStruct((1, num_cores * 128), jnp.float32),
        grid_spec=pltpu.PrefetchScalarGridSpec(
            num_scalar_prefetch=0,
            grid=(num_cores, steps_per_core),
            in_specs=[
                pl.BlockSpec((C, tile_n_eff),
                             lambda c, i: (0, c * steps_per_core + i)),
                pl.BlockSpec((2, tile_n_eff),
                             lambda c, i: (0, c * steps_per_core + i)),
            ],
            out_specs=pl.BlockSpec((1, 128), lambda c, i: (0, c)),
            scratch_shapes=[pltpu.VMEM((1, tile_n_eff), jnp.float32)],
        ),
        compiler_params=pltpu.CompilerParams(
            dimension_semantics=("parallel", "arbitrary")),
    )(pred_t, side)

    total = jnp.sum(partials.reshape(num_cores, 128)[:, 0])
    # loss_weight (and focal_alpha when focal is on) hoisted out of the hot
    # loop; mean over all N points (ignored points count in the denominator,
    # matching torch reduction='none' followed by .mean()).
    scale = float(loss_weight) * (float(focal_alpha) if use_focal else 1.0)
    return total * (scale / N)


def _reference_loss(pred, target, coord, offset, **kw):
    """Pure-JAX reference mirroring the PyTorch forward (use_focal=False)."""
    loss_weight = kw.get("loss_weight", 1.0)
    ignore_index = kw.get("ignore_index", -1)
    sl, sr = kw.get("sigma_left", 0.1), kw.get("sigma_right", 0.4)
    cf, mv = kw.get("clamp_factor", 2.0), kw.get("min_val", 0.1)
    N = pred.shape[0]
    batch = jnp.searchsorted(offset, jnp.arange(N), side="right")
    z = coord[:, 2].astype(jnp.float32)
    seg = target.astype(jnp.int32)
    logp = jax.nn.log_softmax(pred.astype(jnp.float32), axis=-1)
    valid = seg != ignore_index
    safe_t = jnp.where(valid, seg, 0)
    ce = -jnp.take_along_axis(logp, safe_t[:, None], axis=1)[:, 0]
    seg_loss = jnp.where(valid, ce, 0.0) * loss_weight
    weights = jnp.zeros_like(z)
    for b in range(int(offset.shape[0])):
        bm = batch == b
        gmax = jnp.max(jnp.where(bm & (seg == 0), z, -jnp.inf))
        z_ground_max = jnp.where(jnp.isneginf(gmax),
                                 jnp.min(jnp.where(bm, z, jnp.inf)), gmax)
        pmin = jnp.min(jnp.where(bm & (seg == 1), z, jnp.inf))
        z_plant_min = jnp.where(jnp.isposinf(pmin),
                                jnp.max(jnp.where(bm, z, -jnp.inf)), pmin)
        mu = z_ground_max + (z_plant_min - z_ground_max) / 2.0
        d = z - mu
        wl = jnp.exp(-(d ** 2) / (2 * sl ** 2))
        wr = jnp.exp(-(d ** 2) / (2 * sr ** 2))
        wr = jnp.where(d > cf * sr, mv, wr)
        wb = jnp.where(z <= mu, wl, wr)
        weights = jnp.where(bm, wb, weights)
    return jnp.mean(seg_loss * weights)


if __name__ == "__main__":
    key = jax.random.PRNGKey(0)
    N, C = 256, 8                      # 2 "scenes" of 128 points, 8 classes
    k1, k2, k3, k4 = jax.random.split(key, 4)

    pred = jax.random.normal(k1, (N, C), dtype=jnp.float32)
    target = jax.random.randint(k2, (N,), 0, C, dtype=jnp.int32)
    # sprinkle a few ignore_index labels
    ignore_mask = jax.random.uniform(k4, (N,)) < 0.05
    target = jnp.where(ignore_mask, -1, target)
    coord = jax.random.uniform(k3, (N, 3), dtype=jnp.float32) * 2.0
    offset = jnp.array([128, 256], dtype=jnp.int32)   # cumulative point counts

    loss = gauss_cross_entropy_loss0(pred, target, coord, offset)
    loss = jax.block_until_ready(loss)

    ref = _reference_loss(pred, target, coord, offset)
    np.testing.assert_allclose(np.asarray(loss), np.asarray(ref),
                               rtol=1e-5, atol=1e-6)
    print("KERNEL_OK")
</pallas_src>

<mosaic_0001>
module attributes {stable_mosaic.version = 11 : i64} {
  func.func @_gauss_ce_kernel(%arg0: i32, %arg1: i32, %arg2: memref<8x256xf32, #tpu.memory_space<vmem>>, %arg3: memref<2x256xf32, #tpu.memory_space<vmem>>, %arg4: memref<1x128xf32, #tpu.memory_space<vmem>>, %arg5: memref<1x256xf32, #tpu.memory_space<vmem>>) attributes {dimension_semantics = [#tpu.dimension_semantics<parallel>, #tpu.dimension_semantics<arbitrary>], iteration_bounds = array<i64: 1, 1>, scalar_prefetch = 0 : i64, scratch_operands = 1 : i64, tpu.core_type = #tpu.core_type<tc>, window_params = [{transform_indices = @transform_0, window_bounds = array<i64: 8, 256>}, {transform_indices = @transform_1, window_bounds = array<i64: 2, 256>}, {transform_indices = @transform_2, window_bounds = array<i64: 1, 128>}]} {
    %c0_i32 = arith.constant 0 : i32
    %0 = arith.cmpi eq, %arg1, %c0_i32 : i32
    %1 = arith.extui %0 : i1 to i32
    %c0_i32_0 = arith.constant 0 : i32
    %2 = arith.cmpi ne, %1, %c0_i32_0 : i32
    scf.if %2 {
      %cst_14 = arith.constant 0.000000e+00 : f32
      %36 = vector.broadcast %cst_14 : f32 to vector<1x256xf32>
      %c0_15 = arith.constant 0 : index
      %c0_16 = arith.constant 0 : index
      %37 = vector.load %arg5[%c0_15, %c0_16] : memref<1x256xf32, #tpu.memory_space<vmem>>, vector<1x256xf32>
      tpu.vector_store %arg5[%c0_15, %c0_16], %36 {strides = array<i32>} : memref<1x256xf32, #tpu.memory_space<vmem>>, vector<1x256xf32>,
    } else {
    }
    %c0 = arith.constant 0 : index
    %c0_1 = arith.constant 0 : index
    %3 = vector.load %arg2[%c0, %c0_1] : memref<8x256xf32, #tpu.memory_space<vmem>>, vector<8x256xf32>
    %c0_2 = arith.constant 0 : index
    %c0_3 = arith.constant 0 : index
    %4 = vector.load %arg3[%c0_2, %c0_3] : memref<2x256xf32, #tpu.memory_space<vmem>>, vector<2x256xf32>
    %5 = vector.extract_strided_slice %4 {offsets = [0, 0], sizes = [1, 256], strides = [1, 1]} : vector<2x256xf32> to vector<1x256xf32>
    %6 = arith.fptosi %5 : vector<1x256xf32> to vector<1x256xi32>
    %7 = vector.extract_strided_slice %4 {offsets = [1, 0], sizes = [1, 256], strides = [1, 1]} : vector<2x256xf32> to vector<1x256xf32>
    %cst = arith.constant dense<0xFF800000> : vector<256xf32>
    %8 = vector.multi_reduction <maximumf>, %3, %cst [0] : vector<8x256xf32> to vector<256xf32>
    %9 = vector.shape_cast %8 : vector<256xf32> to vector<1x256xf32>
    %10 = vector.broadcast %9 : vector<1x256xf32> to vector<8x256xf32>
    %11 = arith.subf %3, %10 : vector<8x256xf32>
    %12 = math.exp %11 : vector<8x256xf32>
    %cst_4 = arith.constant dense<0.000000e+00> : vector<256xf32>
    %13 = vector.multi_reduction <add>, %12, %cst_4 [0] : vector<8x256xf32> to vector<256xf32>
    %14 = vector.shape_cast %13 : vector<256xf32> to vector<1x256xf32>
    %15 = math.log %14 : vector<1x256xf32>
    %16 = arith.addf %15, %9 : vector<1x256xf32>
    %17 = tpu.iota {dimensions = array<i32: 0>} : vector<8x256xi32>
    %18 = vector.broadcast %6 : vector<1x256xi32> to vector<8x256xi32>
    %19 = arith.cmpi eq, %17, %18 : vector<8x256xi32>
    %cst_5 = arith.constant 0.000000e+00 : f32
    %20 = vector.broadcast %cst_5 : f32 to vector<8x256xf32>
    %21 = arith.select %19, %3, %20 : vector<8x256xi1>, vector<8x256xf32>
    %cst_6 = arith.constant dense<0.000000e+00> : vector<256xf32>
    %22 = vector.multi_reduction <add>, %21, %cst_6 [0] : vector<8x256xf32> to vector<256xf32>
    %23 = vector.shape_cast %22 : vector<256xf32> to vector<1x256xf32>
    %24 = arith.subf %16, %23 : vector<1x256xf32>
    %c-1_i32 = arith.constant -1 : i32
    %25 = vector.broadcast %c-1_i32 : i32 to vector<1x256xi32>
    %26 = arith.cmpi ne, %6, %25 : vector<1x256xi32>
    %cst_7 = arith.constant 0.000000e+00 : f32
    %27 = vector.broadcast %cst_7 : f32 to vector<1x256xf32>
    %28 = arith.select %26, %24, %27 : vector<1x256xi1>, vector<1x256xf32>
    %c0_8 = arith.constant 0 : index
    %c0_9 = arith.constant 0 : index
    %29 = vector.load %arg5[%c0_8, %c0_9] : memref<1x256xf32, #tpu.memory_space<vmem>>, vector<1x256xf32>
    %30 = arith.mulf %28, %7 : vector<1x256xf32>
    %31 = arith.addf %29, %30 : vector<1x256xf32>
    %c0_10 = arith.constant 0 : index
    %c0_11 = arith.constant 0 : index
    %32 = vector.load %arg5[%c0_10, %c0_11] : memref<1x256xf32, #tpu.memory_space<vmem>>, vector<1x256xf32>
    tpu.vector_store %arg5[%c0_10, %c0_11], %31 {strides = array<i32>} : memref<1x256xf32, #tpu.memory_space<vmem>>, vector<1x256xf32>,
    %c0_i32_12 = arith.constant 0 : i32
    %33 = arith.cmpi eq, %arg1, %c0_i32_12 : i32
    %34 = arith.extui %33 : i1 to i32
    %c0_i32_13 = arith.constant 0 : i32
    %35 = arith.cmpi ne, %34, %c0_i32_13 : i32
    scf.if %35 {
      %c0_14 = arith.constant 0 : index
      %c0_15 = arith.constant 0 : index
      %36 = vector.load %arg5[%c0_14, %c0_15] : memref<1x256xf32, #tpu.memory_space<vmem>>, vector<1x256xf32>
      %37 = vector.shape_cast %36 : vector<1x256xf32> to vector<1x1x256xf32>
      %cst_16 = arith.constant dense<0.000000e+00> : vector<1xf32>
      %38 = vector.multi_reduction <add>, %37, %cst_16 [1, 2] : vector<1x1x256xf32> to vector<1xf32>
      %39 = vector.shape_cast %38 : vector<1xf32> to vector<1x1x1xf32>
      %40 = vector.extract %39[0, 0, 0] : f32 from vector<1x1x1xf32>
      %41 = vector.broadcast %40 : f32 to vector<1x128xf32>
      %c0_17 = arith.constant 0 : index
      %c0_18 = arith.constant 0 : index
      %42 = vector.load %arg4[%c0_17, %c0_18] : memref<1x128xf32, #tpu.memory_space<vmem>>, vector<1x128xf32>
      tpu.vector_store %arg4[%c0_17, %c0_18], %41 {strides = array<i32>} : memref<1x128xf32, #tpu.memory_space<vmem>>, vector<1x128xf32>,
    } else {
    }
    return
  }
  func.func @transform_0(%arg0: i32, %arg1: i32) -> (i32, i32) {
    %c1_i32 = arith.constant 1 : i32
    %0 = arith.muli %arg0, %c1_i32 : i32
    %1 = arith.addi %0, %arg1 : i32
    %c0_i32 = arith.constant 0 : i32
    %c0_i32_0 = arith.constant 0 : i32
    return %c0_i32, %1 : i32, i32
  }
  func.func @transform_1(%arg0: i32, %arg1: i32) -> (i32, i32) {
    %c1_i32 = arith.constant 1 : i32
    %0 = arith.muli %arg0, %c1_i32 : i32
    %1 = arith.addi %0, %arg1 : i32
    %c0_i32 = arith.constant 0 : i32
    %c0_i32_0 = arith.constant 0 : i32
    return %c0_i32, %1 : i32, i32
  }
  func.func @transform_2(%arg0: i32, %arg1: i32) -> (i32, i32) {
    %c0_i32 = arith.constant 0 : i32
    %c0_i32_0 = arith.constant 0 : i32
    return %c0_i32, %arg0 : i32, i32
  }
}

</mosaic_0001>

<llo_original>
// kernel: tpu_custom_call.1
$region0: #{tpu_custom_call.1}
  #allocation0 [shape = 'u32[]', space=smem, size = 0x4, offset = 0x4, fixed_abs, tag = 'smem constant byte address 0x4 - core index']
  #allocation1 [shape = 'u32[144,128]{1,0:T(1,128)}', space=vmem, size = 0x12000, scoped, tag = 'internal scratch']
  #allocation2 [shape = 'f32[1,256]{1,0:T(1,128)}', space=vmem, size = 0x400, scoped, tag = 'scratch operand']
  %s0 = inlined_call_operand.hbm [shape: f32[8,256], index: 0, kind: input, shape index: {}]
  %s1 = inlined_call_operand.hbm [shape: f32[2,256], index: 1, kind: input, shape index: {}]
  %s2 = inlined_call_operand.hbm [shape: f32[1,128], index: 2, kind: output, shape index: {}]
  %s3 = sld [smem:[#allocation0]]
  $region34: #{tpu_custom_call.1} parent=0
    _
  %s5 = ssub.s32 1, %s3
  %s6 = scalar_select 0, %s5, %s3
  $region1: #{tpu_custom_call.1} parent=0
    #allocation3 [shape = 'u8[8192]{0}', space=vmem, size = 0x2000, scoped, tag = 'input window, operand 0, single buffered']
    #allocation4 [shape = 's32[1]{0}', space=sflag, size = 0x4, scoped, tag = 'scoped memory for tpu_custom_call.1']
    #allocation5 [shape = 's32[1]{0}', space=sflag, size = 0x4, scoped, tag = 'scoped memory for tpu_custom_call.1']
    #allocation6 [shape = 'u8[2048]{0}', space=vmem, size = 0x800, scoped, tag = 'input window, operand 1, single buffered']
    #allocation7 [shape = 's32[1]{0}', space=sflag, size = 0x4, scoped, tag = 'scoped memory for tpu_custom_call.1']
    #allocation8 [shape = 'u8[512]{0}', space=vmem, size = 0x400, scoped, tag = 'output window, operand 0, single buffered']
    %7 = vsyncpa [#allocation4], 0
    %8 = vsyncpa [#allocation7], 0
    %9 = vsyncpa [#allocation5], 0
    // Predicated region
    $region2: #{tpu_custom_call.1} parent=1 // pred_check
      _
    $region3: #{tpu_custom_call.1} parent=1 // pred_check_branch
      %11 = sbr.rel (0) target = $region5
    $region4: #{tpu_custom_call.1} parent=1 // pred_region
      %s12 = sadd.s32 0, 0
      %s13 = smul.u32 2, %s12
      %s15 = ssub.s32 256, 256
      %16 = vsyncadd [#allocation4], %s15
      %s17 = smul.addr %s13, 128
      %s18 = scalar_lea.hbm %s0, %s17
      %s20 = sshll.u32 [#allocation3], 4
      %s21 = int_to_ptr.vmem [resolvable:$true] %s20
      %23 = dma.hbm_to_vmem [thread:$0]  %s18, 256, %s21, [#allocation4]
    $region5: #{tpu_custom_call.1} parent=1 // pred_fallthru
      _
    // Predicated region
    $region6: #{tpu_custom_call.1} parent=1 // pred_check
      _
    $region7: #{tpu_custom_call.1} parent=1 // pred_check_branch
      %25 = sbr.rel (0) target = $region9
    $region8: #{tpu_custom_call.1} parent=1 // pred_region
      %s26 = sadd.s32 0, 0
      %s27 = smul.u32 2, %s26
      %s29 = ssub.s32 64, 64
      %30 = vsyncadd [#allocation7], %s29
      %s31 = smul.addr %s27, 32
      %s32 = scalar_lea.hbm %s1, %s31
      %s34 = sshll.u32 [#allocation6], 4
      %s35 = int_to_ptr.vmem [resolvable:$true] %s34
      %37 = dma.hbm_to_vmem [thread:$0]  %s32, 64, %s35, [#allocation7]
    $region9: #{tpu_custom_call.1} parent=1 // pred_fallthru
      _
    // Predicated region
    $region10: #{tpu_custom_call.1} parent=1 // pred_check
      _
    $region11: #{tpu_custom_call.1} parent=1 // pred_check_branch
      %39 = sbr.rel (0) target = $region13
    $region12: #{tpu_custom_call.1} parent=1 // pred_region
      %40 = dma.done [#allocation4], 256
    $region13: #{tpu_custom_call.1} parent=1 // pred_fallthru
      _
    // Predicated region
    $region14: #{tpu_custom_call.1} parent=1 // pred_check
      _
    $region15: #{tpu_custom_call.1} parent=1 // pred_check_branch
      %42 = sbr.rel (0) target = $region17
    $region16: #{tpu_custom_call.1} parent=1 // pred_region
      %43 = dma.done [#allocation7], 64
    $region17: #{tpu_custom_call.1} parent=1 // pred_fallthru
      _
    %s44 = sadd.s32 0, 0
    %s45 = smul.u32 2, %s44
    %s46 = sadd.s32 0, 0
    %s47 = smul.u32 2, %s46
    %p48 = scmp.eq.s32.totalorder 0, 0
    // Predicated region
    $region18: #{tpu_custom_call.1} parent=1 // pred_check
      %p49 = pneg %p48
    $region19: #{tpu_custom_call.1} parent=1 // pred_check_branch
      %51 = sbr.rel (%p49) target = $region21
    $region20: #{tpu_custom_call.1} parent=1 // pred_region
      %v52 = vlaneseq
      %vm53 = vcmp.ge.s32.totalorder %v52, 0
      %vm54 = vcmp.lt.s32.totalorder %v52, 256
      %vm55 = vmand %vm53, %vm54
      %56 = vst.msk [vmem:[#allocation2] sm:$0x3] %vm55, 0.0
    $region21: #{tpu_custom_call.1} parent=1 // pred_fallthru
      _
    %v57 = vld [vmem:[#allocation3] sm:$0xff]
    %v58 = vld [vmem:[#allocation3 + $0x8] sm:$0xff]
    %v59 = vld [vmem:[#allocation6] sm:$0xf]
    %v60 = vcvt.f32.s32.to.zero.pseudo %v59
    %v61 = vrot.slane %v57, 4
    %v62 = vmax.f32 %v57, %v61
    %v63 = vrot.slane %v62, 2
    %v64 = vmax.f32 %v62, %v63
    %v65 = vrot.slane %v64, 1
    %v66 = vmax.f32 %v64, %v65
    %v67 = vrot.slane %v58, 4
    %v68 = vmax.f32 %v58, %v67
    %v69 = vrot.slane %v68, 2
    %v70 = vmax.f32 %v68, %v69
    %v71 = vrot.slane %v70, 1
    %v72 = vmax.f32 %v70, %v71
    %v73 = vsub.f32 %v57, %v66
    %v74 = vsub.f32 %v58, %v72
    %v75 = vmul.f32 %v73, 1.442695
    %v76 = vpow.pop %v75
    %v77 = vmul.f32 %v74, 1.442695
    %v78 = vpow.pop %v77
    %v79 = vrot.slane %v76, 4
    %v80 = vadd.f32 %v76, %v79
    %v81 = vrot.slane %v80, 2
    %v82 = vadd.f32 %v80, %v81
    %v83 = vrot.slane %v82, 1
    %v84 = vadd.f32 %v82, %v83
    %v85 = vrot.slane %v78, 4
    %v86 = vadd.f32 %v78, %v85
    %v87 = vrot.slane %v86, 2
    %v88 = vadd.f32 %v86, %v87
    %v89 = vrot.slane %v88, 1
    %v90 = vadd.f32 %v88, %v89
    %v91 = vlog2.pop %v84
    %v92 = vmul.f32 %v91, 0.6931472
    %v93 = vlog2.pop %v90
    %v94 = vmul.f32 %v93, 0.6931472
    %v95 = vadd.f32 %v92, %v66
    %v96 = vadd.f32 %v94, %v72
    %v97 = vlaneseq
    %v98 = vshrl.u32 %v97, 7
    %v99 = vlaneseq
    %v100 = vshrl.u32 %v99, 7
    %v101 = vsub.s32 0, %v100
    %v102 = vrot.slane %v60, %v101
    %v103 = vlaneseq
    %v104 = vshrl.u32 %v103, 7
    %v105 = vsub.s32 2, %v104
    %v106 = vrot.slane %v60, %v105
    %v107 = vlaneseq
    %v108 = vshrl.u32 %v107, 7
    %v109 = vsub.s32 0, %v108
    %v110 = vrot.slane %v102, %v109
    %v111 = vlaneseq
    %v112 = vshrl.u32 %v111, 7
    %v113 = vsub.s32 0, %v112
    %v114 = vrot.slane %v106, %v113
    %vm115 = vcmp.eq.s32.totalorder %v98, %v110
    %vm116 = vcmp.eq.s32.totalorder %v98, %v114
    %v117 = vsel %vm115, %v57, 0.0
    %v118 = vsel %vm116, %v58, 0.0
    %v119 = vrot.slane %v117, 4
    %v120 = vadd.f32 %v117, %v119
    %v121 = vrot.slane %v120, 2
    %v122 = vadd.f32 %v120, %v121
    %v123 = vrot.slane %v122, 1
    %v124 = vadd.f32 %v122, %v123
    %v125 = vrot.slane %v118, 4
    %v126 = vadd.f32 %v118, %v125
    %v127 = vrot.slane %v126, 2
    %v128 = vadd.f32 %v126, %v127
    %v129 = vrot.slane %v128, 1
    %v130 = vadd.f32 %v128, %v129
    %v131 = vsub.f32 %v95, %v124
    %v132 = vsub.f32 %v96, %v130
    %vm133 = vcmp.ne.s32.totalorder %v60, 4294967295
    %v136 = vcombine.low %v131, %v132
    %v138 = vunpack.c.l.s4 1983009808
    %v139 = vunpack.c.0.s8 %v138
    %v140 = vlaneseq
    %v141 = vshrl.u32 %v140, 7
    %v142 = vsub.s32 %v139, %v141
    %v143 = vrot.slane %v136, %v142
    %v145 = vsel %vm133, %v143, 0.0
    %v146 = vld [vmem:[#allocation2] sm:$0x3]
    %v148 = vrot.slane %v59, 7
    %v149 = vrot.slane %v148, 2
    %v151 = vmul.f32 %v145, %v149
    %v154 = vunpack.c.l.s4 1966171168
    %v155 = vunpack.c.0.s8 %v154
    %v156 = vlaneseq
    %v157 = vshrl.u32 %v156, 7
    %v158 = vsub.s32 %v155, %v157
    %v159 = vrot.slane %v151, %v158
    %v161 = vadd.f32 %v146, %v159
    %v162 = vlaneseq
    %vm163 = vcmp.ge.s32.totalorder %v162, 0
    %vm164 = vcmp.lt.s32.totalorder %v162, 256
    %vm165 = vmand %vm163, %vm164
    %166 = vst.msk [vmem:[#allocation2] sm:$0x3] %vm165, %v161
    // Predicated region
    $region22: #{tpu_custom_call.1} parent=1 // pred_check
      %p167 = pneg %p48
    $region23: #{tpu_custom_call.1} parent=1 // pred_check_branch
      %169 = sbr.rel (%p167) target = $region25
    $region24: #{tpu_custom_call.1} parent=1 // pred_region
      %v170 = vld [vmem:[#allocation2] sm:$0x3]
      %v172 = vlaneseq
      %v173 = vshrl.u32 %v172, 7
      %v174 = vsub.s32 0, %v173
      %v175 = vrot.slane %v170, %v174
      %v176 = vlaneseq
      %v177 = vshrl.u32 %v176, 7
      %v178 = vsub.s32 1, %v177
      %v179 = vrot.slane %v170, %v178
      %vm182 = vcmask 1040384
      %v183 = vsel %vm182, %v175, 0.0
      %v184 = vsel %vm182, %v179, 0.0
      %v185 = vadd.f32 %v183, %v184
      %186 = vadd.xlane.f32.xlu0 %v185
      %v187 = vpop.xlane.xlu0 %186
      %v188 = vrot.slane %v187, 4
      %v189 = vadd.f32 %v187, %v188
      %v190 = vrot.slane %v189, 2
      %v191 = vadd.f32 %v189, %v190
      %v192 = vrot.slane %v191, 1
      %v193 = vadd.f32 %v191, %v192
      %s194 = vtos %v193
      %v195 = vstv %s194
      %196 = vst [vmem:[#allocation8] sm:$0x1] %v195
    $region25: #{tpu_custom_call.1} parent=1 // pred_fallthru
      _
    // Predicated region
    $region26: #{tpu_custom_call.1} parent=1 // pred_check
      _
    $region27: #{tpu_custom_call.1} parent=1 // pred_check_branch
      %198 = sbr.rel (0) target = $region29
    $region28: #{tpu_custom_call.1} parent=1 // pred_region
      %s200 = ssub.s32 16, 16
      %201 = vsyncadd [#allocation5], %s200
      %s203 = sshll.u32 [#allocation8], 4
      %s204 = int_to_ptr.vmem [resolvable:$true] %s203
      %206 = dma.vmem_to_hbm [thread:$0]  %s204, 16, %s2, [#allocation5]
    $region29: #{tpu_custom_call.1} parent=1 // pred_fallthru
      _
    // Predicated region
    $region30: #{tpu_custom_call.1} parent=1 // pred_check
      _
    $region31: #{tpu_custom_call.1} parent=1 // pred_check_branch
      %208 = sbr.rel (0) target = $region33
    $region32: #{tpu_custom_call.1} parent=1 // pred_region
      %209 = dma.done [#allocation5], 16
    $region33: #{tpu_custom_call.1} parent=1 // pred_fallthru
      _
    %210 = vsyncpa [#allocation4], 1
    %211 = vsyncpa [#allocation7], 1
    %212 = vsyncpa [#allocation5], 1

</llo_original>
